<compile_context>
chip_gen: v7x
topology: tpu7x:2x2x1
jax: 0.10.0
libtpu: 0.0.40
codegen_flags: <defaults>
</compile_context>

<pallas_src>
import functools

import jax
import jax.numpy as jnp
from jax.experimental import pallas as pl
from jax.experimental.pallas import tpu as pltpu


# ----------------------------------------------------------------------------- helpers

_FLAT_SEL_BUDGET_BYTES = 4 * 1024 * 1024  # max size of the fused one-hot matrix


def _sel_dtype(x_dtype):
    # One-hot selection is exact in bf16/f16; keep matmul operands in x.dtype
    # for low-precision activations, otherwise use f32.
    if x_dtype == jnp.bfloat16 or x_dtype == jnp.float16:
        return x_dtype
    return jnp.float32


def _vmem_limit_bytes():
    # Size the scoped-VMEM limit to the chip: ~3/4 of physical, capped at 96 MiB
    # (v7x has 64 MiB physical -> 48 MiB; v5e/v6e have 128 MiB -> 96 MiB).
    try:
        cap = int(pltpu.get_tpu_info().vmem_capacity_bytes)
        return int(min(cap * 3 // 4, 96 * 1024 * 1024))
    except Exception:
        return 32 * 1024 * 1024


def _pick_channel_tile(nc, per_channel_bytes, target_bytes, cap):
    """Pick a channel-tile size: multiple of 8 (or the full extent), VMEM-budgeted."""
    if nc <= 8:
        return nc
    t = max(1, target_bytes // max(int(per_channel_bytes), 1))
    t = min(t, cap)
    if t >= nc:
        return nc
    return max(8, (t // 8) * 8)


# ----------------------------------------------------------------------------- kernels

def _upsample_flat_kernel(x_ref, sel_ref, o_ref):
    # x_ref:   (TC, Din*Hin*Win)
    # sel_ref: (Din*Hin*Win, Dout*Hout*Wout)  one-hot column-selection matrix
    # o_ref:   (TC, Dout*Hout*Wout)           lane-dense output slab
    o_ref[...] = jnp.dot(
        x_ref[...], sel_ref[...], preferred_element_type=jnp.float32
    ).astype(o_ref.dtype)


def _upsample_planes_kernel(x_ref, sh_ref, swt_ref, o_ref, *, tc, sd):
    # x_ref:   (TC, 1, H_in,  W_in)   source planes (depth picked by index_map)
    # sh_ref:  (H_out, H_in)          one-hot row selection (nearest along H)
    # swt_ref: (W_in,  W_out)         one-hot column selection^T (nearest along W)
    # o_ref:   (TC, SD, H_out, W_out) SD = fused integer depth-replication factor
    sh = sh_ref[...]
    swt = swt_ref[...]
    for c in range(tc):  # static unroll over the channel tile
        plane = x_ref[c, 0, :, :]                                          # (H_in, W_in)
        t = jnp.dot(plane, swt, preferred_element_type=jnp.float32)        # (H_in, W_out)
        oc = jnp.dot(sh, t, preferred_element_type=jnp.float32)            # (H_out, W_out)
        oc = oc.astype(o_ref.dtype)
        for d in range(sd):  # replicate across the fused output depth slices
            o_ref[c, d, :, :] = oc


# ----------------------------------------------------------------------------- wrapper

def upsample_nearest3d_pallas(x, output_size):
    """Nearest-neighbor 3D resize; semantics of F.interpolate(x, size=..., mode='nearest').

    x: (N, C, D_in, H_in, W_in); output_size: (D_out, H_out, W_out).
    PyTorch 'nearest' uses src_idx = floor(dst_idx * in_size / out_size).
    """
    N, C, D_in, H_in, W_in = x.shape
    D_out, H_out, W_out = (int(s) for s in output_size)
    if (D_in, H_in, W_in) == (D_out, H_out, W_out):
        return x

    NC = N * C
    sel_dt = _sel_dtype(x.dtype)
    esize = jnp.dtype(x.dtype).itemsize
    vmem_limit = _vmem_limit_bytes()

    d_src = (jnp.arange(D_out) * D_in) // D_out
    h_src = (jnp.arange(H_out) * H_in) // H_out
    w_src = (jnp.arange(W_out) * W_in) // W_out

    dhw_in = D_in * H_in * W_in
    dhw_out = D_out * H_out * W_out
    sel_bytes = dhw_in * dhw_out * jnp.dtype(sel_dt).itemsize

    if sel_bytes <= _FLAT_SEL_BUDGET_BYTES:
        # ---------------- fused single-matmul path (small levels) ----------------
        # out_flat[c, k] = x_flat[c, src(k)]  for k = d*Hout*Wout + h*Wout + w.
        src_flat = (d_src[:, None, None] * (H_in * W_in)
                    + h_src[None, :, None] * W_in
                    + w_src[None, None, :]).reshape(-1)                    # (dhw_out,)
        sel = jax.nn.one_hot(src_flat, dhw_in, dtype=sel_dt).T             # (dhw_in, dhw_out)

        x2 = x.reshape(NC, dhw_in)                                          # free (contiguous)
        per_ch = (dhw_in + dhw_out) * esize
        tc = _pick_channel_tile(NC, per_ch, target_bytes=2 * 1024 * 1024, cap=128)
        grid = (pl.cdiv(NC, tc),)

        out2 = pl.pallas_call(
            _upsample_flat_kernel,
            out_shape=jax.ShapeDtypeStruct((NC, dhw_out), x.dtype),
            grid_spec=pltpu.PrefetchScalarGridSpec(
                num_scalar_prefetch=0,
                grid=grid,
                in_specs=[
                    pl.BlockSpec((tc, dhw_in), lambda i: (i, 0)),
                    pl.BlockSpec((dhw_in, dhw_out), lambda i: (0, 0)),
                ],
                out_specs=pl.BlockSpec((tc, dhw_out), lambda i: (i, 0)),
            ),
            compiler_params=pltpu.CompilerParams(
                dimension_semantics=("parallel",),
                vmem_limit_bytes=vmem_limit,
            ),
        )(x2, sel)
        return out2.reshape(N, C, D_out, H_out, W_out)

    # ---------------- general tiled path (large levels) ----------------
    Sh = jax.nn.one_hot(h_src, H_in, dtype=sel_dt)        # (H_out, H_in)
    SwT = jax.nn.one_hot(w_src, W_in, dtype=sel_dt).T     # (W_in, W_out)

    # Fuse integer depth upscaling into the output block (replication in-kernel).
    sd = D_out // D_in if (D_out % D_in == 0) else 1
    d_grid = D_out // sd

    x4 = x.reshape(NC, D_in, H_in, W_in)
    per_ch = (H_in * W_in + sd * H_out * W_out) * esize
    tc = _pick_channel_tile(NC, per_ch, target_bytes=2 * 1024 * 1024, cap=32)
    grid = (pl.cdiv(NC, tc), d_grid)

    kernel = functools.partial(_upsample_planes_kernel, tc=tc, sd=sd)

    out4 = pl.pallas_call(
        kernel,
        out_shape=jax.ShapeDtypeStruct((NC, D_out, H_out, W_out), x.dtype),
        grid_spec=pltpu.PrefetchScalarGridSpec(
            num_scalar_prefetch=0,
            grid=grid,
            in_specs=[
                # depth-axis nearest gather happens here, in the index_map
                # (reduces to `od` when sd > 1, i.e. one input plane per sd outputs):
                pl.BlockSpec(
                    (tc, 1, H_in, W_in),
                    lambda i, od: (i, (od * sd * D_in) // D_out, 0, 0),
                ),
                pl.BlockSpec((H_out, H_in), lambda i, od: (0, 0)),
                pl.BlockSpec((W_in, W_out), lambda i, od: (0, 0)),
            ],
            out_specs=pl.BlockSpec(
                (tc, sd, H_out, W_out), lambda i, od: (i, od, 0, 0)
            ),
        ),
        compiler_params=pltpu.CompilerParams(
            dimension_semantics=("parallel", "parallel"),
            vmem_limit_bytes=vmem_limit,
        ),
    )(x4, Sh, SwT)
    return out4.reshape(N, C, D_out, H_out, W_out)


class Upsampling:
    """JAX/Pallas mirror of the PyTorch Upsampling module (interpolation path)."""

    def __init__(self, transposed_conv, in_channels=None, out_channels=None,
                 kernel_size=3, scale_factor=(2, 2, 2), mode='nearest'):
        if transposed_conv:
            # TODO(synk): ConvTranspose3d(output_size=...) path not implemented in Pallas.
            raise NotImplementedError("transposed_conv=True path not implemented")
        if mode != 'nearest':
            raise NotImplementedError("only mode='nearest' is implemented")

    def __call__(self, encoder_features, x):
        output_size = encoder_features.shape[2:]
        return upsample_nearest3d_pallas(x, output_size)


def _reference_nearest3d(x, output_size):
    """Pure-jnp reference of F.interpolate(..., mode='nearest') for verification."""
    D_out, H_out, W_out = output_size
    _, _, D_in, H_in, W_in = x.shape
    d_src = (jnp.arange(D_out) * D_in) // D_out
    h_src = (jnp.arange(H_out) * H_in) // H_out
    w_src = (jnp.arange(W_out) * W_in) // W_out
    y = jnp.take(x, d_src, axis=2)
    y = jnp.take(y, h_src, axis=3)
    y = jnp.take(y, w_src, axis=4)
    return y


if __name__ == "__main__":
    key = jax.random.PRNGKey(0)
    k1, k2, k3 = jax.random.split(key, 3)

    up = Upsampling(transposed_conv=False, mode='nearest')

    # 1) Deep UNet level (fused single-matmul, lane-dense path), 2x upsampling.
    x1 = jax.random.normal(k1, (2, 4, 4, 8, 8), dtype=jnp.float32)
    enc1 = jnp.zeros((2, 2, 8, 16, 16), dtype=jnp.float32)
    out1 = jax.block_until_ready(up(enc1, x1))
    ref1 = _reference_nearest3d(x1, enc1.shape[2:])
    assert out1.shape == (2, 4, 8, 16, 16), out1.shape
    assert jnp.allclose(out1, ref1, atol=1e-6, rtol=1e-6), "flat path mismatch"

    # 2) Larger spatial level (general channel-tiled path with fused depth), 2x.
    x2 = jax.random.normal(k2, (1, 8, 4, 32, 32), dtype=jnp.float32)
    enc2 = jnp.zeros((1, 1, 8, 64, 64), dtype=jnp.float32)
    out2 = jax.block_until_ready(up(enc2, x2))
    ref2 = _reference_nearest3d(x2, enc2.shape[2:])
    assert out2.shape == (1, 8, 8, 64, 64), out2.shape
    assert jnp.allclose(out2, ref2, atol=1e-6, rtol=1e-6), "general path mismatch"

    # 3) Arbitrary (non-integer) resize, as allowed by F.interpolate(size=...).
    x3 = jax.random.normal(k3, (1, 2, 3, 5, 7), dtype=jnp.float32)
    enc3 = jnp.zeros((1, 1, 7, 9, 11), dtype=jnp.float32)
    out3 = jax.block_until_ready(up(enc3, x3))
    ref3 = _reference_nearest3d(x3, enc3.shape[2:])
    assert out3.shape == (1, 2, 7, 9, 11), out3.shape
    assert jnp.allclose(out3, ref3, atol=1e-6, rtol=1e-6), "non-integer resize mismatch"

    # 4) bf16 activations stay bf16 end-to-end (one-hot selection is exact in bf16).
    xb = x1.astype(jnp.bfloat16)
    outb = jax.block_until_ready(up(enc1, xb))
    refb = _reference_nearest3d(xb, enc1.shape[2:])
    assert outb.dtype == jnp.bfloat16
    assert jnp.array_equal(outb, refb), "bf16 path mismatch"

    print("KERNEL_OK")
</pallas_src>

<mosaic_0001>
module attributes {stable_mosaic.version = 11 : i64} {
  func.func @_upsample_flat_kernel(%arg0: i32, %arg1: memref<8x256xf32, #tpu.memory_space<vmem>>, %arg2: memref<256x2048xf32, #tpu.memory_space<vmem>>, %arg3: memref<8x2048xf32, #tpu.memory_space<vmem>>) attributes {dimension_semantics = [#tpu.dimension_semantics<parallel>], iteration_bounds = array<i64: 1>, scalar_prefetch = 0 : i64, scratch_operands = 0 : i64, tpu.core_type = #tpu.core_type<tc>, window_params = [{transform_indices = @transform_0, window_bounds = array<i64: 8, 256>}, {pipeline_mode = #tpu.pipeline_mode<synchronous>, transform_indices = @transform_1, window_bounds = array<i64: 256, 2048>}, {transform_indices = @transform_2, window_bounds = array<i64: 8, 2048>}]} {
    %c0 = arith.constant 0 : index
    %c0_0 = arith.constant 0 : index
    %0 = vector.load %arg1[%c0, %c0_0] : memref<8x256xf32, #tpu.memory_space<vmem>>, vector<8x256xf32>
    %c0_1 = arith.constant 0 : index
    %c0_2 = arith.constant 0 : index
    %1 = vector.load %arg2[%c0_1, %c0_2] : memref<256x2048xf32, #tpu.memory_space<vmem>>, vector<256x2048xf32>
    %cst = arith.constant dense<0.000000e+00> : vector<8x2048xf32>
    %2 = tpu.matmul %0, %1, %cst {dimension_numbers = #tpu.dot_dimension_numbers<[1], [0], [0], [1], [0, 0, 1, 1], [], []>} : vector<8x256xf32>, vector<256x2048xf32>, vector<8x2048xf32> -> vector<8x2048xf32>
    %c0_3 = arith.constant 0 : index
    %c0_4 = arith.constant 0 : index
    %3 = vector.load %arg3[%c0_3, %c0_4] : memref<8x2048xf32, #tpu.memory_space<vmem>>, vector<8x2048xf32>
    tpu.vector_store %arg3[%c0_3, %c0_4], %2 {strides = array<i32>} : memref<8x2048xf32, #tpu.memory_space<vmem>>, vector<8x2048xf32>,
    return
  }
  func.func @transform_0(%arg0: i32) -> (i32, i32) {
    %c0_i32 = arith.constant 0 : i32
    %c0_i32_0 = arith.constant 0 : i32
    return %arg0, %c0_i32 : i32, i32
  }
  func.func @transform_1(%arg0: i32) -> (i32, i32) {
    %c0_i32 = arith.constant 0 : i32
    %c0_i32_0 = arith.constant 0 : i32
    %c0_i32_1 = arith.constant 0 : i32
    return %c0_i32, %c0_i32_0 : i32, i32
  }
  func.func @transform_2(%arg0: i32) -> (i32, i32) {
    %c0_i32 = arith.constant 0 : i32
    %c0_i32_0 = arith.constant 0 : i32
    return %arg0, %c0_i32 : i32, i32
  }
}

</mosaic_0001>

<llo_original>
// kernel: tpu_custom_call.1
$region0: #{tpu_custom_call.1}
  #allocation0 [shape = 'u32[]', space=smem, size = 0x4, offset = 0x4, fixed_abs, tag = 'smem constant byte address 0x4 - core index']
  #allocation1 [shape = 'u32[144,128]{1,0:T(1,128)}', space=vmem, size = 0x12000, scoped, tag = 'internal scratch']
  %s0 = inlined_call_operand.hbm [shape: f32[8,256], index: 0, kind: input, shape index: {}]
  %s1 = inlined_call_operand.hbm [shape: f32[256,2048], index: 1, kind: input, shape index: {}]
  %s2 = inlined_call_operand.hbm [shape: f32[8,2048], index: 2, kind: output, shape index: {}]
  %s3 = sld [smem:[#allocation0]]
  $region26: #{tpu_custom_call.1} parent=0
    _
  %s5 = ssub.s32 1, %s3
  %s6 = scalar_select 0, %s5, %s3
  $region1: #{tpu_custom_call.1} parent=0
    #allocation2 [shape = 'u8[8192]{0}', space=vmem, size = 0x2000, scoped, tag = 'input window, operand 0, single buffered']
    #allocation3 [shape = 's32[1]{0}', space=sflag, size = 0x4, scoped, tag = 'scoped memory for tpu_custom_call.1']
    #allocation4 [shape = 's32[1]{0}', space=sflag, size = 0x4, scoped, tag = 'scoped memory for tpu_custom_call.1']
    #allocation5 [shape = 'u8[2097152]{0}', space=vmem, size = 0x200000, scoped, tag = 'input window, operand 1, single buffered']
    #allocation6 [shape = 's32[1]{0}', space=sflag, size = 0x4, scoped, tag = 'scoped memory for tpu_custom_call.1']
    #allocation7 [shape = 'u8[65536]{0}', space=vmem, size = 0x10000, scoped, tag = 'output window, operand 0, single buffered']
    %7 = vsyncpa [#allocation3], 0
    %8 = vsyncpa [#allocation6], 0
    %9 = vsyncpa [#allocation4], 0
    // Predicated region
    $region2: #{tpu_custom_call.1} parent=1 // pred_check
      _
    $region3: #{tpu_custom_call.1} parent=1 // pred_check_branch
      %11 = sbr.rel (0) target = $region5
    $region4: #{tpu_custom_call.1} parent=1 // pred_region
      %s13 = ssub.s32 256, 256
      %14 = vsyncadd [#allocation3], %s13
      %s16 = sshll.u32 [#allocation2], 4
      %s17 = int_to_ptr.vmem [resolvable:$true] %s16
      %19 = dma.hbm_to_vmem [thread:$0]  %s0, 256, %s17, [#allocation3]
    $region5: #{tpu_custom_call.1} parent=1 // pred_fallthru
      _
    // Predicated region
    $region6: #{tpu_custom_call.1} parent=1 // pred_check
      _
    $region7: #{tpu_custom_call.1} parent=1 // pred_check_branch
      %21 = sbr.rel (0) target = $region9
    $region8: #{tpu_custom_call.1} parent=1 // pred_region
      %s23 = ssub.s32 65536, 65536
      %24 = vsyncadd [#allocation6], %s23
      %s25 = sshll.u32 [#allocation5], 4
      %s26 = int_to_ptr.vmem [resolvable:$true] %s25
      %31 = dma.hbm_to_vmem [thread:$0]  %s1, 65536, %s26, [#allocation6], 2048, 2048, 128
    $region9: #{tpu_custom_call.1} parent=1 // pred_fallthru
      _
    // Predicated region
    $region10: #{tpu_custom_call.1} parent=1 // pred_check
      _
    $region11: #{tpu_custom_call.1} parent=1 // pred_check_branch
      %33 = sbr.rel (0) target = $region13
    $region12: #{tpu_custom_call.1} parent=1 // pred_region
      %34 = dma.done [#allocation3], 256
    $region13: #{tpu_custom_call.1} parent=1 // pred_fallthru
      _
    // Predicated region
    $region14: #{tpu_custom_call.1} parent=1 // pred_check
      _
    $region15: #{tpu_custom_call.1} parent=1 // pred_check_branch
      %36 = sbr.rel (0) target = $region17
    $region16: #{tpu_custom_call.1} parent=1 // pred_region
      %37 = dma.done [#allocation6], 65536
    $region17: #{tpu_custom_call.1} parent=1 // pred_fallthru
      _
    %v38 = vld [vmem:[#allocation2] sm:$0xff]
    %v39 = vld [vmem:[#allocation2 + $0x8] sm:$0xff]
    %v40 = vld [vmem:[#allocation5] sm:$0xff]
    %v41 = vld [vmem:[#allocation5 + $0x8] sm:$0xff]
    %v42 = vld [vmem:[#allocation5 + $0x10] sm:$0xff]
    %v43 = vld [vmem:[#allocation5 + $0x18] sm:$0xff]
    %v44 = vld [vmem:[#allocation5 + $0x20] sm:$0xff]
    %v45 = vld [vmem:[#allocation5 + $0x28] sm:$0xff]
    %v46 = vld [vmem:[#allocation5 + $0x30] sm:$0xff]
    %v47 = vld [vmem:[#allocation5 + $0x38] sm:$0xff]
    %v48 = vld [vmem:[#allocation5 + $0x40] sm:$0xff]
    %v49 = vld [vmem:[#allocation5 + $0x48] sm:$0xff]
    %v50 = vld [vmem:[#allocation5 + $0x50] sm:$0xff]
    %v51 = vld [vmem:[#allocation5 + $0x58] sm:$0xff]
    %v52 = vld [vmem:[#allocation5 + $0x60] sm:$0xff]
    %v53 = vld [vmem:[#allocation5 + $0x68] sm:$0xff]
    %v54 = vld [vmem:[#allocation5 + $0x70] sm:$0xff]
    %v55 = vld [vmem:[#allocation5 + $0x78] sm:$0xff]
    %v56 = vld [vmem:[#allocation5 + $0x80] sm:$0xff]
    %v57 = vld [vmem:[#allocation5 + $0x88] sm:$0xff]
    %v58 = vld [vmem:[#allocation5 + $0x90] sm:$0xff]
    %v59 = vld [vmem:[#allocation5 + $0x98] sm:$0xff]
    %v60 = vld [vmem:[#allocation5 + $0xa0] sm:$0xff]
    %v61 = vld [vmem:[#allocation5 + $0xa8] sm:$0xff]
    %v62 = vld [vmem:[#allocation5 + $0xb0] sm:$0xff]
    %v63 = vld [vmem:[#allocation5 + $0xb8] sm:$0xff]
    %v64 = vld [vmem:[#allocation5 + $0xc0] sm:$0xff]
    %v65 = vld [vmem:[#allocation5 + $0xc8] sm:$0xff]
    %v66 = vld [vmem:[#allocation5 + $0xd0] sm:$0xff]
    %v67 = vld [vmem:[#allocation5 + $0xd8] sm:$0xff]
    %v68 = vld [vmem:[#allocation5 + $0xe0] sm:$0xff]
    %v69 = vld [vmem:[#allocation5 + $0xe8] sm:$0xff]
    %v70 = vld [vmem:[#allocation5 + $0xf0] sm:$0xff]
    %v71 = vld [vmem:[#allocation5 + $0xf8] sm:$0xff]
    %v72 = vld [vmem:[#allocation5 + $0x100] sm:$0xff]
    %v73 = vld [vmem:[#allocation5 + $0x108] sm:$0xff]
    %v74 = vld [vmem:[#allocation5 + $0x110] sm:$0xff]
    %v75 = vld [vmem:[#allocation5 + $0x118] sm:$0xff]
    %v76 = vld [vmem:[#allocation5 + $0x120] sm:$0xff]
    %v77 = vld [vmem:[#allocation5 + $0x128] sm:$0xff]
    %v78 = vld [vmem:[#allocation5 + $0x130] sm:$0xff]
    %v79 = vld [vmem:[#allocation5 + $0x138] sm:$0xff]
    %v80 = vld [vmem:[#allocation5 + $0x140] sm:$0xff]
    %v81 = vld [vmem:[#allocation5 + $0x148] sm:$0xff]
    %v82 = vld [vmem:[#allocation5 + $0x150] sm:$0xff]
    %v83 = vld [vmem:[#allocation5 + $0x158] sm:$0xff]
    %v84 = vld [vmem:[#allocation5 + $0x160] sm:$0xff]
    %v85 = vld [vmem:[#allocation5 + $0x168] sm:$0xff]
    %v86 = vld [vmem:[#allocation5 + $0x170] sm:$0xff]
    %v87 = vld [vmem:[#allocation5 + $0x178] sm:$0xff]
    %v88 = vld [vmem:[#allocation5 + $0x180] sm:$0xff]
    %v89 = vld [vmem:[#allocation5 + $0x188] sm:$0xff]
    %v90 = vld [vmem:[#allocation5 + $0x190] sm:$0xff]
    %v91 = vld [vmem:[#allocation5 + $0x198] sm:$0xff]
    %v92 = vld [vmem:[#allocation5 + $0x1a0] sm:$0xff]
    %v93 = vld [vmem:[#allocation5 + $0x1a8] sm:$0xff]
    %v94 = vld [vmem:[#allocation5 + $0x1b0] sm:$0xff]
    %v95 = vld [vmem:[#allocation5 + $0x1b8] sm:$0xff]
    %v96 = vld [vmem:[#allocation5 + $0x1c0] sm:$0xff]
    %v97 = vld [vmem:[#allocation5 + $0x1c8] sm:$0xff]
    %v98 = vld [vmem:[#allocation5 + $0x1d0] sm:$0xff]
    %v99 = vld [vmem:[#allocation5 + $0x1d8] sm:$0xff]
    %v100 = vld [vmem:[#allocation5 + $0x1e0] sm:$0xff]
    %v101 = vld [vmem:[#allocation5 + $0x1e8] sm:$0xff]
    %v102 = vld [vmem:[#allocation5 + $0x1f0] sm:$0xff]
    %v103 = vld [vmem:[#allocation5 + $0x1f8] sm:$0xff]
    %v104 = vld [vmem:[#allocation5 + $0x200] sm:$0xff]
    %v105 = vld [vmem:[#allocation5 + $0x208] sm:$0xff]
    %v106 = vld [vmem:[#allocation5 + $0x210] sm:$0xff]
    %v107 = vld [vmem:[#allocation5 + $0x218] sm:$0xff]
    %v108 = vld [vmem:[#allocation5 + $0x220] sm:$0xff]
    %v109 = vld [vmem:[#allocation5 + $0x228] sm:$0xff]
    %v110 = vld [vmem:[#allocation5 + $0x230] sm:$0xff]
    %v111 = vld [vmem:[#allocation5 + $0x238] sm:$0xff]
    %v112 = vld [vmem:[#allocation5 + $0x240] sm:$0xff]
    %v113 = vld [vmem:[#allocation5 + $0x248] sm:$0xff]
    %v114 = vld [vmem:[#allocation5 + $0x250] sm:$0xff]
    %v115 = vld [vmem:[#allocation5 + $0x258] sm:$0xff]
    %v116 = vld [vmem:[#allocation5 + $0x260] sm:$0xff]
    %v117 = vld [vmem:[#allocation5 + $0x268] sm:$0xff]
    %v118 = vld [vmem:[#allocation5 + $0x270] sm:$0xff]
    %v119 = vld [vmem:[#allocation5 + $0x278] sm:$0xff]
    %v120 = vld [vmem:[#allocation5 + $0x280] sm:$0xff]
    %v121 = vld [vmem:[#allocation5 + $0x288] sm:$0xff]
    %v122 = vld [vmem:[#allocation5 + $0x290] sm:$0xff]
    %v123 = vld [vmem:[#allocation5 + $0x298] sm:$0xff]
    %v124 = vld [vmem:[#allocation5 + $0x2a0] sm:$0xff]
    %v125 = vld [vmem:[#allocation5 + $0x2a8] sm:$0xff]
    %v126 = vld [vmem:[#allocation5 + $0x2b0] sm:$0xff]
    %v127 = vld [vmem:[#allocation5 + $0x2b8] sm:$0xff]
    %v128 = vld [vmem:[#allocation5 + $0x2c0] sm:$0xff]
    %v129 = vld [vmem:[#allocation5 + $0x2c8] sm:$0xff]
    %v130 = vld [vmem:[#allocation5 + $0x2d0] sm:$0xff]
    %v131 = vld [vmem:[#allocation5 + $0x2d8] sm:$0xff]
    %v132 = vld [vmem:[#allocation5 + $0x2e0] sm:$0xff]
    %v133 = vld [vmem:[#allocation5 + $0x2e8] sm:$0xff]
    %v134 = vld [vmem:[#allocation5 + $0x2f0] sm:$0xff]
    %v135 = vld [vmem:[#allocation5 + $0x2f8] sm:$0xff]
    %v136 = vld [vmem:[#allocation5 + $0x300] sm:$0xff]
    %v137 = vld [vmem:[#allocation5 + $0x308] sm:$0xff]
    %v138 = vld [vmem:[#allocation5 + $0x310] sm:$0xff]
    %v139 = vld [vmem:[#allocation5 + $0x318] sm:$0xff]
    %v140 = vld [vmem:[#allocation5 + $0x320] sm:$0xff]
    %v141 = vld [vmem:[#allocation5 + $0x328] sm:$0xff]
    %v142 = vld [vmem:[#allocation5 + $0x330] sm:$0xff]
    %v143 = vld [vmem:[#allocation5 + $0x338] sm:$0xff]
    %v144 = vld [vmem:[#allocation5 + $0x340] sm:$0xff]
    %v145 = vld [vmem:[#allocation5 + $0x348] sm:$0xff]
    %v146 = vld [vmem:[#allocation5 + $0x350] sm:$0xff]
    %v147 = vld [vmem:[#allocation5 + $0x358] sm:$0xff]
    %v148 = vld [vmem:[#allocation5 + $0x360] sm:$0xff]
    %v149 = vld [vmem:[#allocation5 + $0x368] sm:$0xff]
    %v150 = vld [vmem:[#allocation5 + $0x370] sm:$0xff]
    %v151 = vld [vmem:[#allocation5 + $0x378] sm:$0xff]
    %v152 = vld [vmem:[#allocation5 + $0x380] sm:$0xff]
    %v153 = vld [vmem:[#allocation5 + $0x388] sm:$0xff]
    %v154 = vld [vmem:[#allocation5 + $0x390] sm:$0xff]
    %v155 = vld [vmem:[#allocation5 + $0x398] sm:$0xff]
    %v156 = vld [vmem:[#allocation5 + $0x3a0] sm:$0xff]
    %v157 = vld [vmem:[#allocation5 + $0x3a8] sm:$0xff]
    %v158 = vld [vmem:[#allocation5 + $0x3b0] sm:$0xff]
    %v159 = vld [vmem:[#allocation5 + $0x3b8] sm:$0xff]
    %v160 = vld [vmem:[#allocation5 + $0x3c0] sm:$0xff]
    %v161 = vld [vmem:[#allocation5 + $0x3c8] sm:$0xff]
    %v162 = vld [vmem:[#allocation5 + $0x3d0] sm:$0xff]
    %v163 = vld [vmem:[#allocation5 + $0x3d8] sm:$0xff]
    %v164 = vld [vmem:[#allocation5 + $0x3e0] sm:$0xff]
    %v165 = vld [vmem:[#allocation5 + $0x3e8] sm:$0xff]
    %v166 = vld [vmem:[#allocation5 + $0x3f0] sm:$0xff]
    %v167 = vld [vmem:[#allocation5 + $0x3f8] sm:$0xff]
    %v168 = vld [vmem:[#allocation5 + $0x400] sm:$0xff]
    %v169 = vld [vmem:[#allocation5 + $0x408] sm:$0xff]
    %v170 = vld [vmem:[#allocation5 + $0x410] sm:$0xff]
    %v171 = vld [vmem:[#allocation5 + $0x418] sm:$0xff]
    %v172 = vld [vmem:[#allocation5 + $0x420] sm:$0xff]
    %v173 = vld [vmem:[#allocation5 + $0x428] sm:$0xff]
    %v174 = vld [vmem:[#allocation5 + $0x430] sm:$0xff]
    %v175 = vld [vmem:[#allocation5 + $0x438] sm:$0xff]
    %v176 = vld [vmem:[#allocation5 + $0x440] sm:$0xff]
    %v177 = vld [vmem:[#allocation5 + $0x448] sm:$0xff]
    %v178 = vld [vmem:[#allocation5 + $0x450] sm:$0xff]
    %v179 = vld [vmem:[#allocation5 + $0x458] sm:$0xff]
    %v180 = vld [vmem:[#allocation5 + $0x460] sm:$0xff]
    %v181 = vld [vmem:[#allocation5 + $0x468] sm:$0xff]
    %v182 = vld [vmem:[#allocation5 + $0x470] sm:$0xff]
    %v183 = vld [vmem:[#allocation5 + $0x478] sm:$0xff]
    %v184 = vld [vmem:[#allocation5 + $0x480] sm:$0xff]
    %v185 = vld [vmem:[#allocation5 + $0x488] sm:$0xff]
    %v186 = vld [vmem:[#allocation5 + $0x490] sm:$0xff]
    %v187 = vld [vmem:[#allocation5 + $0x498] sm:$0xff]
    %v188 = vld [vmem:[#allocation5 + $0x4a0] sm:$0xff]
    %v189 = vld [vmem:[#allocation5 + $0x4a8] sm:$0xff]
    %v190 = vld [vmem:[#allocation5 + $0x4b0] sm:$0xff]
    %v191 = vld [vmem:[#allocation5 + $0x4b8] sm:$0xff]
    %v192 = vld [vmem:[#allocation5 + $0x4c0] sm:$0xff]
    %v193 = vld [vmem:[#allocation5 + $0x4c8] sm:$0xff]
    %v194 = vld [vmem:[#allocation5 + $0x4d0] sm:$0xff]
    %v195 = vld [vmem:[#allocation5 + $0x4d8] sm:$0xff]
    %v196 = vld [vmem:[#allocation5 + $0x4e0] sm:$0xff]
    %v197 = vld [vmem:[#allocation5 + $0x4e8] sm:$0xff]
    %v198 = vld [vmem:[#allocation5 + $0x4f0] sm:$0xff]
    %v199 = vld [vmem:[#allocation5 + $0x4f8] sm:$0xff]
    %v200 = vld [vmem:[#allocation5 + $0x500] sm:$0xff]
    %v201 = vld [vmem:[#allocation5 + $0x508] sm:$0xff]
    %v202 = vld [vmem:[#allocation5 + $0x510] sm:$0xff]
    %v203 = vld [vmem:[#allocation5 + $0x518] sm:$0xff]
    %v204 = vld [vmem:[#allocation5 + $0x520] sm:$0xff]
    %v205 = vld [vmem:[#allocation5 + $0x528] sm:$0xff]
    %v206 = vld [vmem:[#allocation5 + $0x530] sm:$0xff]
    %v207 = vld [vmem:[#allocation5 + $0x538] sm:$0xff]
    %v208 = vld [vmem:[#allocation5 + $0x540] sm:$0xff]
    %v209 = vld [vmem:[#allocation5 + $0x548] sm:$0xff]
    %v210 = vld [vmem:[#allocation5 + $0x550] sm:$0xff]
    %v211 = vld [vmem:[#allocation5 + $0x558] sm:$0xff]
    %v212 = vld [vmem:[#allocation5 + $0x560] sm:$0xff]
    %v213 = vld [vmem:[#allocation5 + $0x568] sm:$0xff]
    %v214 = vld [vmem:[#allocation5 + $0x570] sm:$0xff]
    %v215 = vld [vmem:[#allocation5 + $0x578] sm:$0xff]
    %v216 = vld [vmem:[#allocation5 + $0x580] sm:$0xff]
    %v217 = vld [vmem:[#allocation5 + $0x588] sm:$0xff]
    %v218 = vld [vmem:[#allocation5 + $0x590] sm:$0xff]
    %v219 = vld [vmem:[#allocation5 + $0x598] sm:$0xff]
    %v220 = vld [vmem:[#allocation5 + $0x5a0] sm:$0xff]
    %v221 = vld [vmem:[#allocation5 + $0x5a8] sm:$0xff]
    %v222 = vld [vmem:[#allocation5 + $0x5b0] sm:$0xff]
    %v223 = vld [vmem:[#allocation5 + $0x5b8] sm:$0xff]
    %v224 = vld [vmem:[#allocation5 + $0x5c0] sm:$0xff]
    %v225 = vld [vmem:[#allocation5 + $0x5c8] sm:$0xff]
    %v226 = vld [vmem:[#allocation5 + $0x5d0] sm:$0xff]
    %v227 = vld [vmem:[#allocation5 + $0x5d8] sm:$0xff]
    %v228 = vld [vmem:[#allocation5 + $0x5e0] sm:$0xff]
    %v229 = vld [vmem:[#allocation5 + $0x5e8] sm:$0xff]
    %v230 = vld [vmem:[#allocation5 + $0x5f0] sm:$0xff]
    %v231 = vld [vmem:[#allocation5 + $0x5f8] sm:$0xff]
    %v232 = vld [vmem:[#allocation5 + $0x600] sm:$0xff]
    %v233 = vld [vmem:[#allocation5 + $0x608] sm:$0xff]
    %v234 = vld [vmem:[#allocation5 + $0x610] sm:$0xff]
    %v235 = vld [vmem:[#allocation5 + $0x618] sm:$0xff]
    %v236 = vld [vmem:[#allocation5 + $0x620] sm:$0xff]
    %v237 = vld [vmem:[#allocation5 + $0x628] sm:$0xff]
    %v238 = vld [vmem:[#allocation5 + $0x630] sm:$0xff]
    %v239 = vld [vmem:[#allocation5 + $0x638] sm:$0xff]
    %v240 = vld [vmem:[#allocation5 + $0x640] sm:$0xff]
    %v241 = vld [vmem:[#allocation5 + $0x648] sm:$0xff]
    %v242 = vld [vmem:[#allocation5 + $0x650] sm:$0xff]
    %v243 = vld [vmem:[#allocation5 + $0x658] sm:$0xff]
    %v244 = vld [vmem:[#allocation5 + $0x660] sm:$0xff]
    %v245 = vld [vmem:[#allocation5 + $0x668] sm:$0xff]
    %v246 = vld [vmem:[#allocation5 + $0x670] sm:$0xff]
    %v247 = vld [vmem:[#allocation5 + $0x678] sm:$0xff]
    %v248 = vld [vmem:[#allocation5 + $0x680] sm:$0xff]
    %v249 = vld [vmem:[#allocation5 + $0x688] sm:$0xff]
    %v250 = vld [vmem:[#allocation5 + $0x690] sm:$0xff]
    %v251 = vld [vmem:[#allocation5 + $0x698] sm:$0xff]
    %v252 = vld [vmem:[#allocation5 + $0x6a0] sm:$0xff]
    %v253 = vld [vmem:[#allocation5 + $0x6a8] sm:$0xff]
    %v254 = vld [vmem:[#allocation5 + $0x6b0] sm:$0xff]
    %v255 = vld [vmem:[#allocation5 + $0x6b8] sm:$0xff]
    %v256 = vld [vmem:[#allocation5 + $0x6c0] sm:$0xff]
    %v257 = vld [vmem:[#allocation5 + $0x6c8] sm:$0xff]
    %v258 = vld [vmem:[#allocation5 + $0x6d0] sm:$0xff]
    %v259 = vld [vmem:[#allocation5 + $0x6d8] sm:$0xff]
    %v260 = vld [vmem:[#allocation5 + $0x6e0] sm:$0xff]
    %v261 = vld [vmem:[#allocation5 + $0x6e8] sm:$0xff]
    %v262 = vld [vmem:[#allocation5 + $0x6f0] sm:$0xff]
    %v263 = vld [vmem:[#allocation5 + $0x6f8] sm:$0xff]
    %v264 = vld [vmem:[#allocation5 + $0x700] sm:$0xff]
    %v265 = vld [vmem:[#allocation5 + $0x708] sm:$0xff]
    %v266 = vld [vmem:[#allocation5 + $0x710] sm:$0xff]
    %v267 = vld [vmem:[#allocation5 + $0x718] sm:$0xff]
    %v268 = vld [vmem:[#allocation5 + $0x720] sm:$0xff]
    %v269 = vld [vmem:[#allocation5 + $0x728] sm:$0xff]
    %v270 = vld [vmem:[#allocation5 + $0x730] sm:$0xff]
    %v271 = vld [vmem:[#allocation5 + $0x738] sm:$0xff]
    %v272 = vld [vmem:[#allocation5 + $0x740] sm:$0xff]
    %v273 = vld [vmem:[#allocation5 + $0x748] sm:$0xff]
    %v274 = vld [vmem:[#allocation5 + $0x750] sm:$0xff]
    %v275 = vld [vmem:[#allocation5 + $0x758] sm:$0xff]
    %v276 = vld [vmem:[#allocation5 + $0x760] sm:$0xff]
    %v277 = vld [vmem:[#allocation5 + $0x768] sm:$0xff]
    %v278 = vld [vmem:[#allocation5 + $0x770] sm:$0xff]
    %v279 = vld [vmem:[#allocation5 + $0x778] sm:$0xff]
    %v280 = vld [vmem:[#allocation5 + $0x780] sm:$0xff]
    %v281 = vld [vmem:[#allocation5 + $0x788] sm:$0xff]
    %v282 = vld [vmem:[#allocation5 + $0x790] sm:$0xff]
    %v283 = vld [vmem:[#allocation5 + $0x798] sm:$0xff]
    %v284 = vld [vmem:[#allocation5 + $0x7a0] sm:$0xff]
    %v285 = vld [vmem:[#allocation5 + $0x7a8] sm:$0xff]
    %v286 = vld [vmem:[#allocation5 + $0x7b0] sm:$0xff]
    %v287 = vld [vmem:[#allocation5 + $0x7b8] sm:$0xff]
    %v288 = vld [vmem:[#allocation5 + $0x7c0] sm:$0xff]
    %v289 = vld [vmem:[#allocation5 + $0x7c8] sm:$0xff]
    %v290 = vld [vmem:[#allocation5 + $0x7d0] sm:$0xff]
    %v291 = vld [vmem:[#allocation5 + $0x7d8] sm:$0xff]
    %v292 = vld [vmem:[#allocation5 + $0x7e0] sm:$0xff]
    %v293 = vld [vmem:[#allocation5 + $0x7e8] sm:$0xff]
    %v294 = vld [vmem:[#allocation5 + $0x7f0] sm:$0xff]
    %v295 = vld [vmem:[#allocation5 + $0x7f8] sm:$0xff]
    %v296 = vld [vmem:[#allocation5 + $0x800] sm:$0xff]
    %v297 = vld [vmem:[#allocation5 + $0x808] sm:$0xff]
    %v298 = vld [vmem:[#allocation5 + $0x810] sm:$0xff]
    %v299 = vld [vmem:[#allocation5 + $0x818] sm:$0xff]
    %v300 = vld [vmem:[#allocation5 + $0x820] sm:$0xff]
    %v301 = vld [vmem:[#allocation5 + $0x828] sm:$0xff]
    %v302 = vld [vmem:[#allocation5 + $0x830] sm:$0xff]
    %v303 = vld [vmem:[#allocation5 + $0x838] sm:$0xff]
    %v304 = vld [vmem:[#allocation5 + $0x840] sm:$0xff]
    %v305 = vld [vmem:[#allocation5 + $0x848] sm:$0xff]
    %v306 = vld [vmem:[#allocation5 + $0x850] sm:$0xff]
    %v307 = vld [vmem:[#allocation5 + $0x858] sm:$0xff]
    %v308 = vld [vmem:[#allocation5 + $0x860] sm:$0xff]
    %v309 = vld [vmem:[#allocation5 + $0x868] sm:$0xff]
    %v310 = vld [vmem:[#allocation5 + $0x870] sm:$0xff]
    %v311 = vld [vmem:[#allocation5 + $0x878] sm:$0xff]
    %v312 = vld [vmem:[#allocation5 + $0x880] sm:$0xff]
    %v313 = vld [vmem:[#allocation5 + $0x888] sm:$0xff]
    %v314 = vld [vmem:[#allocation5 + $0x890] sm:$0xff]
    %v315 = vld [vmem:[#allocation5 + $0x898] sm:$0xff]
    %v316 = vld [vmem:[#allocation5 + $0x8a0] sm:$0xff]
    %v317 = vld [vmem:[#allocation5 + $0x8a8] sm:$0xff]
    %v318 = vld [vmem:[#allocation5 + $0x8b0] sm:$0xff]
    %v319 = vld [vmem:[#allocation5 + $0x8b8] sm:$0xff]
    %v320 = vld [vmem:[#allocation5 + $0x8c0] sm:$0xff]
    %v321 = vld [vmem:[#allocation5 + $0x8c8] sm:$0xff]
    %v322 = vld [vmem:[#allocation5 + $0x8d0] sm:$0xff]
    %v323 = vld [vmem:[#allocation5 + $0x8d8] sm:$0xff]
    %v324 = vld [vmem:[#allocation5 + $0x8e0] sm:$0xff]
    %v325 = vld [vmem:[#allocation5 + $0x8e8] sm:$0xff]
    %v326 = vld [vmem:[#allocation5 + $0x8f0] sm:$0xff]
    %v327 = vld [vmem:[#allocation5 + $0x8f8] sm:$0xff]
    %v328 = vld [vmem:[#allocation5 + $0x900] sm:$0xff]
    %v329 = vld [vmem:[#allocation5 + $0x908] sm:$0xff]
    %v330 = vld [vmem:[#allocation5 + $0x910] sm:$0xff]
    %v331 = vld [vmem:[#allocation5 + $0x918] sm:$0xff]
    %v332 = vld [vmem:[#allocation5 + $0x920] sm:$0xff]
    %v333 = vld [vmem:[#allocation5 + $0x928] sm:$0xff]
    %v334 = vld [vmem:[#allocation5 + $0x930] sm:$0xff]
    %v335 = vld [vmem:[#allocation5 + $0x938] sm:$0xff]
    %v336 = vld [vmem:[#allocation5 + $0x940] sm:$0xff]
    %v337 = vld [vmem:[#allocation5 + $0x948] sm:$0xff]
    %v338 = vld [vmem:[#allocation5 + $0x950] sm:$0xff]
    %v339 = vld [vmem:[#allocation5 + $0x958] sm:$0xff]
    %v340 = vld [vmem:[#allocation5 + $0x960] sm:$0xff]
    %v341 = vld [vmem:[#allocation5 + $0x968] sm:$0xff]
    %v342 = vld [vmem:[#allocation5 + $0x970] sm:$0xff]
    %v343 = vld [vmem:[#allocation5 + $0x978] sm:$0xff]
    %v344 = vld [vmem:[#allocation5 + $0x980] sm:$0xff]
    %v345 = vld [vmem:[#allocation5 + $0x988] sm:$0xff]
    %v346 = vld [vmem:[#allocation5 + $0x990] sm:$0xff]
    %v347 = vld [vmem:[#allocation5 + $0x998] sm:$0xff]
    %v348 = vld [vmem:[#allocation5 + $0x9a0] sm:$0xff]
    %v349 = vld [vmem:[#allocation5 + $0x9a8] sm:$0xff]
    %v350 = vld [vmem:[#allocation5 + $0x9b0] sm:$0xff]
    %v351 = vld [vmem:[#allocation5 + $0x9b8] sm:$0xff]
    %v352 = vld [vmem:[#allocation5 + $0x9c0] sm:$0xff]
    %v353 = vld [vmem:[#allocation5 + $0x9c8] sm:$0xff]
    %v354 = vld [vmem:[#allocation5 + $0x9d0] sm:$0xff]
    %v355 = vld [vmem:[#allocation5 + $0x9d8] sm:$0xff]
    %v356 = vld [vmem:[#allocation5 + $0x9e0] sm:$0xff]
    %v357 = vld [vmem:[#allocation5 + $0x9e8] sm:$0xff]
    %v358 = vld [vmem:[#allocation5 + $0x9f0] sm:$0xff]
    %v359 = vld [vmem:[#allocation5 + $0x9f8] sm:$0xff]
    %v360 = vld [vmem:[#allocation5 + $0xa00] sm:$0xff]
    %v361 = vld [vmem:[#allocation5 + $0xa08] sm:$0xff]
    %v362 = vld [vmem:[#allocation5 + $0xa10] sm:$0xff]
    %v363 = vld [vmem:[#allocation5 + $0xa18] sm:$0xff]
    %v364 = vld [vmem:[#allocation5 + $0xa20] sm:$0xff]
    %v365 = vld [vmem:[#allocation5 + $0xa28] sm:$0xff]
    %v366 = vld [vmem:[#allocation5 + $0xa30] sm:$0xff]
    %v367 = vld [vmem:[#allocation5 + $0xa38] sm:$0xff]
    %v368 = vld [vmem:[#allocation5 + $0xa40] sm:$0xff]
    %v369 = vld [vmem:[#allocation5 + $0xa48] sm:$0xff]
    %v370 = vld [vmem:[#allocation5 + $0xa50] sm:$0xff]
    %v371 = vld [vmem:[#allocation5 + $0xa58] sm:$0xff]
    %v372 = vld [vmem:[#allocation5 + $0xa60] sm:$0xff]
    %v373 = vld [vmem:[#allocation5 + $0xa68] sm:$0xff]
    %v374 = vld [vmem:[#allocation5 + $0xa70] sm:$0xff]
    %v375 = vld [vmem:[#allocation5 + $0xa78] sm:$0xff]
    %v376 = vld [vmem:[#allocation5 + $0xa80] sm:$0xff]
    %v377 = vld [vmem:[#allocation5 + $0xa88] sm:$0xff]
    %v378 = vld [vmem:[#allocation5 + $0xa90] sm:$0xff]
    %v379 = vld [vmem:[#allocation5 + $0xa98] sm:$0xff]
    %v380 = vld [vmem:[#allocation5 + $0xaa0] sm:$0xff]
    %v381 = vld [vmem:[#allocation5 + $0xaa8] sm:$0xff]
    %v382 = vld [vmem:[#allocation5 + $0xab0] sm:$0xff]
    %v383 = vld [vmem:[#allocation5 + $0xab8] sm:$0xff]
    %v384 = vld [vmem:[#allocation5 + $0xac0] sm:$0xff]
    %v385 = vld [vmem:[#allocation5 + $0xac8] sm:$0xff]
    %v386 = vld [vmem:[#allocation5 + $0xad0] sm:$0xff]
    %v387 = vld [vmem:[#allocation5 + $0xad8] sm:$0xff]
    %v388 = vld [vmem:[#allocation5 + $0xae0] sm:$0xff]
    %v389 = vld [vmem:[#allocation5 + $0xae8] sm:$0xff]
    %v390 = vld [vmem:[#allocation5 + $0xaf0] sm:$0xff]
    %v391 = vld [vmem:[#allocation5 + $0xaf8] sm:$0xff]
    %v392 = vld [vmem:[#allocation5 + $0xb00] sm:$0xff]
    %v393 = vld [vmem:[#allocation5 + $0xb08] sm:$0xff]
    %v394 = vld [vmem:[#allocation5 + $0xb10] sm:$0xff]
    %v395 = vld [vmem:[#allocation5 + $0xb18] sm:$0xff]
    %v396 = vld [vmem:[#allocation5 + $0xb20] sm:$0xff]
    %v397 = vld [vmem:[#allocation5 + $0xb28] sm:$0xff]
    %v398 = vld [vmem:[#allocation5 + $0xb30] sm:$0xff]
    %v399 = vld [vmem:[#allocation5 + $0xb38] sm:$0xff]
    %v400 = vld [vmem:[#allocation5 + $0xb40] sm:$0xff]
    %v401 = vld [vmem:[#allocation5 + $0xb48] sm:$0xff]
    %v402 = vld [vmem:[#allocation5 + $0xb50] sm:$0xff]
    %v403 = vld [vmem:[#allocation5 + $0xb58] sm:$0xff]
    %v404 = vld [vmem:[#allocation5 + $0xb60] sm:$0xff]
    %v405 = vld [vmem:[#allocation5 + $0xb68] sm:$0xff]
    %v406 = vld [vmem:[#allocation5 + $0xb70] sm:$0xff]
    %v407 = vld [vmem:[#allocation5 + $0xb78] sm:$0xff]
    %v408 = vld [vmem:[#allocation5 + $0xb80] sm:$0xff]
    %v409 = vld [vmem:[#allocation5 + $0xb88] sm:$0xff]
    %v410 = vld [vmem:[#allocation5 + $0xb90] sm:$0xff]
    %v411 = vld [vmem:[#allocation5 + $0xb98] sm:$0xff]
    %v412 = vld [vmem:[#allocation5 + $0xba0] sm:$0xff]
    %v413 = vld [vmem:[#allocation5 + $0xba8] sm:$0xff]
    %v414 = vld [vmem:[#allocation5 + $0xbb0] sm:$0xff]
    %v415 = vld [vmem:[#allocation5 + $0xbb8] sm:$0xff]
    %v416 = vld [vmem:[#allocation5 + $0xbc0] sm:$0xff]
    %v417 = vld [vmem:[#allocation5 + $0xbc8] sm:$0xff]
    %v418 = vld [vmem:[#allocation5 + $0xbd0] sm:$0xff]
    %v419 = vld [vmem:[#allocation5 + $0xbd8] sm:$0xff]
    %v420 = vld [vmem:[#allocation5 + $0xbe0] sm:$0xff]
    %v421 = vld [vmem:[#allocation5 + $0xbe8] sm:$0xff]
    %v422 = vld [vmem:[#allocation5 + $0xbf0] sm:$0xff]
    %v423 = vld [vmem:[#allocation5 + $0xbf8] sm:$0xff]
    %v424 = vld [vmem:[#allocation5 + $0xc00] sm:$0xff]
    %v425 = vld [vmem:[#allocation5 + $0xc08] sm:$0xff]
    %v426 = vld [vmem:[#allocation5 + $0xc10] sm:$0xff]
    %v427 = vld [vmem:[#allocation5 + $0xc18] sm:$0xff]
    %v428 = vld [vmem:[#allocation5 + $0xc20] sm:$0xff]
    %v429 = vld [vmem:[#allocation5 + $0xc28] sm:$0xff]
    %v430 = vld [vmem:[#allocation5 + $0xc30] sm:$0xff]
    %v431 = vld [vmem:[#allocation5 + $0xc38] sm:$0xff]
    %v432 = vld [vmem:[#allocation5 + $0xc40] sm:$0xff]
    %v433 = vld [vmem:[#allocation5 + $0xc48] sm:$0xff]
    %v434 = vld [vmem:[#allocation5 + $0xc50] sm:$0xff]
    %v435 = vld [vmem:[#allocation5 + $0xc58] sm:$0xff]
    %v436 = vld [vmem:[#allocation5 + $0xc60] sm:$0xff]
    %v437 = vld [vmem:[#allocation5 + $0xc68] sm:$0xff]
    %v438 = vld [vmem:[#allocation5 + $0xc70] sm:$0xff]
    %v439 = vld [vmem:[#allocation5 + $0xc78] sm:$0xff]
    %v440 = vld [vmem:[#allocation5 + $0xc80] sm:$0xff]
    %v441 = vld [vmem:[#allocation5 + $0xc88] sm:$0xff]
    %v442 = vld [vmem:[#allocation5 + $0xc90] sm:$0xff]
    %v443 = vld [vmem:[#allocation5 + $0xc98] sm:$0xff]
    %v444 = vld [vmem:[#allocation5 + $0xca0] sm:$0xff]
    %v445 = vld [vmem:[#allocation5 + $0xca8] sm:$0xff]
    %v446 = vld [vmem:[#allocation5 + $0xcb0] sm:$0xff]
    %v447 = vld [vmem:[#allocation5 + $0xcb8] sm:$0xff]
    %v448 = vld [vmem:[#allocation5 + $0xcc0] sm:$0xff]
    %v449 = vld [vmem:[#allocation5 + $0xcc8] sm:$0xff]
    %v450 = vld [vmem:[#allocation5 + $0xcd0] sm:$0xff]
    %v451 = vld [vmem:[#allocation5 + $0xcd8] sm:$0xff]
    %v452 = vld [vmem:[#allocation5 + $0xce0] sm:$0xff]
    %v453 = vld [vmem:[#allocation5 + $0xce8] sm:$0xff]
    %v454 = vld [vmem:[#allocation5 + $0xcf0] sm:$0xff]
    %v455 = vld [vmem:[#allocation5 + $0xcf8] sm:$0xff]
    %v456 = vld [vmem:[#allocation5 + $0xd00] sm:$0xff]
    %v457 = vld [vmem:[#allocation5 + $0xd08] sm:$0xff]
    %v458 = vld [vmem:[#allocation5 + $0xd10] sm:$0xff]
    %v459 = vld [vmem:[#allocation5 + $0xd18] sm:$0xff]
    %v460 = vld [vmem:[#allocation5 + $0xd20] sm:$0xff]
    %v461 = vld [vmem:[#allocation5 + $0xd28] sm:$0xff]
    %v462 = vld [vmem:[#allocation5 + $0xd30] sm:$0xff]
    %v463 = vld [vmem:[#allocation5 + $0xd38] sm:$0xff]
    %v464 = vld [vmem:[#allocation5 + $0xd40] sm:$0xff]
    %v465 = vld [vmem:[#allocation5 + $0xd48] sm:$0xff]
    %v466 = vld [vmem:[#allocation5 + $0xd50] sm:$0xff]
    %v467 = vld [vmem:[#allocation5 + $0xd58] sm:$0xff]
    %v468 = vld [vmem:[#allocation5 + $0xd60] sm:$0xff]
    %v469 = vld [vmem:[#allocation5 + $0xd68] sm:$0xff]
    %v470 = vld [vmem:[#allocation5 + $0xd70] sm:$0xff]
    %v471 = vld [vmem:[#allocation5 + $0xd78] sm:$0xff]
    %v472 = vld [vmem:[#allocation5 + $0xd80] sm:$0xff]
    %v473 = vld [vmem:[#allocation5 + $0xd88] sm:$0xff]
    %v474 = vld [vmem:[#allocation5 + $0xd90] sm:$0xff]
    %v475 = vld [vmem:[#allocation5 + $0xd98] sm:$0xff]
    %v476 = vld [vmem:[#allocation5 + $0xda0] sm:$0xff]
    %v477 = vld [vmem:[#allocation5 + $0xda8] sm:$0xff]
    %v478 = vld [vmem:[#allocation5 + $0xdb0] sm:$0xff]
    %v479 = vld [vmem:[#allocation5 + $0xdb8] sm:$0xff]
    %v480 = vld [vmem:[#allocation5 + $0xdc0] sm:$0xff]
    %v481 = vld [vmem:[#allocation5 + $0xdc8] sm:$0xff]
    %v482 = vld [vmem:[#allocation5 + $0xdd0] sm:$0xff]
    %v483 = vld [vmem:[#allocation5 + $0xdd8] sm:$0xff]
    %v484 = vld [vmem:[#allocation5 + $0xde0] sm:$0xff]
    %v485 = vld [vmem:[#allocation5 + $0xde8] sm:$0xff]
    %v486 = vld [vmem:[#allocation5 + $0xdf0] sm:$0xff]
    %v487 = vld [vmem:[#allocation5 + $0xdf8] sm:$0xff]
    %v488 = vld [vmem:[#allocation5 + $0xe00] sm:$0xff]
    %v489 = vld [vmem:[#allocation5 + $0xe08] sm:$0xff]
    %v490 = vld [vmem:[#allocation5 + $0xe10] sm:$0xff]
    %v491 = vld [vmem:[#allocation5 + $0xe18] sm:$0xff]
    %v492 = vld [vmem:[#allocation5 + $0xe20] sm:$0xff]
    %v493 = vld [vmem:[#allocation5 + $0xe28] sm:$0xff]
    %v494 = vld [vmem:[#allocation5 + $0xe30] sm:$0xff]
    %v495 = vld [vmem:[#allocation5 + $0xe38] sm:$0xff]
    %v496 = vld [vmem:[#allocation5 + $0xe40] sm:$0xff]
    %v497 = vld [vmem:[#allocation5 + $0xe48] sm:$0xff]
    %v498 = vld [vmem:[#allocation5 + $0xe50] sm:$0xff]
    %v499 = vld [vmem:[#allocation5 + $0xe58] sm:$0xff]
    %v500 = vld [vmem:[#allocation5 + $0xe60] sm:$0xff]
    %v501 = vld [vmem:[#allocation5 + $0xe68] sm:$0xff]
    %v502 = vld [vmem:[#allocation5 + $0xe70] sm:$0xff]
    %v503 = vld [vmem:[#allocation5 + $0xe78] sm:$0xff]
    %v504 = vld [vmem:[#allocation5 + $0xe80] sm:$0xff]
    %v505 = vld [vmem:[#allocation5 + $0xe88] sm:$0xff]
    %v506 = vld [vmem:[#allocation5 + $0xe90] sm:$0xff]
    %v507 = vld [vmem:[#allocation5 + $0xe98] sm:$0xff]
    %v508 = vld [vmem:[#allocation5 + $0xea0] sm:$0xff]
    %v509 = vld [vmem:[#allocation5 + $0xea8] sm:$0xff]
    %v510 = vld [vmem:[#allocation5 + $0xeb0] sm:$0xff]
    %v511 = vld [vmem:[#allocation5 + $0xeb8] sm:$0xff]
    %v512 = vld [vmem:[#allocation5 + $0xec0] sm:$0xff]
    %v513 = vld [vmem:[#allocation5 + $0xec8] sm:$0xff]
    %v514 = vld [vmem:[#allocation5 + $0xed0] sm:$0xff]
    %v515 = vld [vmem:[#allocation5 + $0xed8] sm:$0xff]
    %v516 = vld [vmem:[#allocation5 + $0xee0] sm:$0xff]
    %v517 = vld [vmem:[#allocation5 + $0xee8] sm:$0xff]
    %v518 = vld [vmem:[#allocation5 + $0xef0] sm:$0xff]
    %v519 = vld [vmem:[#allocation5 + $0xef8] sm:$0xff]
    %v520 = vld [vmem:[#allocation5 + $0xf00] sm:$0xff]
    %v521 = vld [vmem:[#allocation5 + $0xf08] sm:$0xff]
    %v522 = vld [vmem:[#allocation5 + $0xf10] sm:$0xff]
    %v523 = vld [vmem:[#allocation5 + $0xf18] sm:$0xff]
    %v524 = vld [vmem:[#allocation5 + $0xf20] sm:$0xff]
    %v525 = vld [vmem:[#allocation5 + $0xf28] sm:$0xff]
    %v526 = vld [vmem:[#allocation5 + $0xf30] sm:$0xff]
    %v527 = vld [vmem:[#allocation5 + $0xf38] sm:$0xff]
    %v528 = vld [vmem:[#allocation5 + $0xf40] sm:$0xff]
    %v529 = vld [vmem:[#allocation5 + $0xf48] sm:$0xff]
    %v530 = vld [vmem:[#allocation5 + $0xf50] sm:$0xff]
    %v531 = vld [vmem:[#allocation5 + $0xf58] sm:$0xff]
    %v532 = vld [vmem:[#allocation5 + $0xf60] sm:$0xff]
    %v533 = vld [vmem:[#allocation5 + $0xf68] sm:$0xff]
    %v534 = vld [vmem:[#allocation5 + $0xf70] sm:$0xff]
    %v535 = vld [vmem:[#allocation5 + $0xf78] sm:$0xff]
    %v536 = vld [vmem:[#allocation5 + $0xf80] sm:$0xff]
    %v537 = vld [vmem:[#allocation5 + $0xf88] sm:$0xff]
    %v538 = vld [vmem:[#allocation5 + $0xf90] sm:$0xff]
    %v539 = vld [vmem:[#allocation5 + $0xf98] sm:$0xff]
    %v540 = vld [vmem:[#allocation5 + $0xfa0] sm:$0xff]
    %v541 = vld [vmem:[#allocation5 + $0xfa8] sm:$0xff]
    %v542 = vld [vmem:[#allocation5 + $0xfb0] sm:$0xff]
    %v543 = vld [vmem:[#allocation5 + $0xfb8] sm:$0xff]
    %v544 = vld [vmem:[#allocation5 + $0xfc0] sm:$0xff]
    %v545 = vld [vmem:[#allocation5 + $0xfc8] sm:$0xff]
    %v546 = vld [vmem:[#allocation5 + $0xfd0] sm:$0xff]
    %v547 = vld [vmem:[#allocation5 + $0xfd8] sm:$0xff]
    %v548 = vld [vmem:[#allocation5 + $0xfe0] sm:$0xff]
    %v549 = vld [vmem:[#allocation5 + $0xfe8] sm:$0xff]
    %v550 = vld [vmem:[#allocation5 + $0xff0] sm:$0xff]
    %v551 = vld [vmem:[#allocation5 + $0xff8] sm:$0xff]
    %552 = vmatprep.subr.mxu0 %v41
    %553 = vmatpush1.msra.mxu0 %v40
    %554 = vmatprep.subr.mxu0 %v57
    %555 = vmatpush1.msra.mxu0 %v56
    %556 = vmatprep.subr.mxu0 %v73
    %557 = vmatpush1.msra.mxu0 %v72
    %558 = vmatprep.subr.mxu0 %v89
    %559 = vmatpush1.msra.mxu0 %v88
    %560 = vmatprep.subr.mxu0 %v105
    %561 = vmatpush1.msra.mxu0 %v104
    %562 = vmatprep.subr.mxu0 %v121
    %563 = vmatpush1.msra.mxu0 %v120
    %564 = vmatprep.subr.mxu0 %v137
    %565 = vmatpush1.msra.mxu0 %v136
    %566 = vmatprep.subr.mxu0 %v153
    %567 = vmatpush1.msra.mxu0 %v152
    %568 = vmatprep.subr.mxu0 %v169
    %569 = vmatpush1.msra.mxu0 %v168
    %570 = vmatprep.subr.mxu0 %v185
    %571 = vmatpush1.msra.mxu0 %v184
    %572 = vmatprep.subr.mxu0 %v201
    %573 = vmatpush1.msra.mxu0 %v200
    %574 = vmatprep.subr.mxu0 %v217
    %575 = vmatpush1.msra.mxu0 %v216
    %576 = vmatprep.subr.mxu0 %v233
    %577 = vmatpush1.msra.mxu0 %v232
    %578 = vmatprep.subr.mxu0 %v249
    %579 = vmatpush1.msra.mxu0 %v248
    %580 = vmatprep.subr.mxu0 %v265
    %581 = vmatpush1.msra.mxu0 %v264
    %582 = vmatprep.subr.mxu0 %v281
    %583 = vmatpush1.msra.mxu0 %v280
    %584 = vmatprep.subr.mxu0 %v297
    %585 = vmatpush1.msra.mxu0 %v296
    %586 = vmatprep.subr.mxu0 %v313
    %587 = vmatpush1.msra.mxu0 %v312
    %588 = vmatprep.subr.mxu0 %v329
    %589 = vmatpush1.msra.mxu0 %v328
    %590 = vmatprep.subr.mxu0 %v345
    %591 = vmatpush1.msra.mxu0 %v344
    %592 = vmatprep.subr.mxu0 %v361
    %593 = vmatpush1.msra.mxu0 %v360
    %594 = vmatprep.subr.mxu0 %v377
    %595 = vmatpush1.msra.mxu0 %v376
    %596 = vmatprep.subr.mxu0 %v393
    %597 = vmatpush1.msra.mxu0 %v392
    %598 = vmatprep.subr.mxu0 %v409
    %599 = vmatpush1.msra.mxu0 %v408
    %600 = vmatprep.subr.mxu0 %v425
    %601 = vmatpush1.msra.mxu0 %v424
    %602 = vmatprep.subr.mxu0 %v441
    %603 = vmatpush1.msra.mxu0 %v440
    %604 = vmatprep.subr.mxu0 %v457
    %605 = vmatpush1.msra.mxu0 %v456
    %606 = vmatprep.subr.mxu0 %v473
    %607 = vmatpush1.msra.mxu0 %v472
    %608 = vmatprep.subr.mxu0 %v489
    %609 = vmatpush1.msra.mxu0 %v488
    %610 = vmatprep.subr.mxu0 %v505
    %611 = vmatpush1.msra.mxu0 %v504
    %612 = vmatprep.subr.mxu0 %v521
    %613 = vmatpush1.msra.mxu0 %v520
    %614 = vmatprep.subr.mxu0 %v537
    %615 = vmatpush1.msra.mxu0 %v536
    %616 = vmatprep.mubr.f32.mxu0 %v39
    %617 = vmatmul.mubr.f32.gmra.mrb[0].mxu0 %v38
    %v618 = vpop.f32.mrb[0].mxu0
    %v619 = vadd.f32 0.0, %v618
    %v620 = vpop.f32.mrb[0].mxu0
    %v621 = vadd.f32 0.0, %v620
    %622 = vdwg.mxu0
    %623 = vmatprep.subr.mxu0 %v43
    %624 = vmatpush1.msra.mxu0 %v42
    %625 = vmatprep.subr.mxu0 %v59
    %626 = vmatpush1.msra.mxu0 %v58
    %627 = vmatprep.subr.mxu0 %v75
    %628 = vmatpush1.msra.mxu0 %v74
    %629 = vmatprep.subr.mxu0 %v91
    %630 = vmatpush1.msra.mxu0 %v90
    %631 = vmatprep.subr.mxu0 %v107
    %632 = vmatpush1.msra.mxu0 %v106
    %633 = vmatprep.subr.mxu0 %v123
    %634 = vmatpush1.msra.mxu0 %v122
    %635 = vmatprep.subr.mxu0 %v139
    %636 = vmatpush1.msra.mxu0 %v138
    %637 = vmatprep.subr.mxu0 %v155
    %638 = vmatpush1.msra.mxu0 %v154
    %639 = vmatprep.subr.mxu0 %v171
    %640 = vmatpush1.msra.mxu0 %v170
    %641 = vmatprep.subr.mxu0 %v187
    %642 = vmatpush1.msra.mxu0 %v186
    %643 = vmatprep.subr.mxu0 %v203
    %644 = vmatpush1.msra.mxu0 %v202
    %645 = vmatprep.subr.mxu0 %v219
    %646 = vmatpush1.msra.mxu0 %v218
    %647 = vmatprep.subr.mxu0 %v235
    %648 = vmatpush1.msra.mxu0 %v234
    %649 = vmatprep.subr.mxu0 %v251
    %650 = vmatpush1.msra.mxu0 %v250
    %651 = vmatprep.subr.mxu0 %v267
    %652 = vmatpush1.msra.mxu0 %v266
    %653 = vmatprep.subr.mxu0 %v283
    %654 = vmatpush1.msra.mxu0 %v282
    %655 = vmatprep.subr.mxu0 %v299
    %656 = vmatpush1.msra.mxu0 %v298
    %657 = vmatprep.subr.mxu0 %v315
    %658 = vmatpush1.msra.mxu0 %v314
    %659 = vmatprep.subr.mxu0 %v331
    %660 = vmatpush1.msra.mxu0 %v330
    %661 = vmatprep.subr.mxu0 %v347
    %662 = vmatpush1.msra.mxu0 %v346
    %663 = vmatprep.subr.mxu0 %v363
    %664 = vmatpush1.msra.mxu0 %v362
    %665 = vmatprep.subr.mxu0 %v379
    %666 = vmatpush1.msra.mxu0 %v378
    %667 = vmatprep.subr.mxu0 %v395
    %668 = vmatpush1.msra.mxu0 %v394
    %669 = vmatprep.subr.mxu0 %v411
    %670 = vmatpush1.msra.mxu0 %v410
    %671 = vmatprep.subr.mxu0 %v427
    %672 = vmatpush1.msra.mxu0 %v426
    %673 = vmatprep.subr.mxu0 %v443
    %674 = vmatpush1.msra.mxu0 %v442
    %675 = vmatprep.subr.mxu0 %v459
    %676 = vmatpush1.msra.mxu0 %v458
    %677 = vmatprep.subr.mxu0 %v475
    %678 = vmatpush1.msra.mxu0 %v474
    %679 = vmatprep.subr.mxu0 %v491
    %680 = vmatpush1.msra.mxu0 %v490
    %681 = vmatprep.subr.mxu0 %v507
    %682 = vmatpush1.msra.mxu0 %v506
    %683 = vmatprep.subr.mxu0 %v523
    %684 = vmatpush1.msra.mxu0 %v522
    %685 = vmatprep.subr.mxu0 %v539
    %686 = vmatpush1.msra.mxu0 %v538
    %687 = vmatprep.mubr.f32.mxu0 %v39
    %688 = vmatmul.mubr.f32.gmra.mrb[0].mxu0 %v38
    %v689 = vpop.f32.mrb[0].mxu0
    %v690 = vadd.f32 0.0, %v689
    %v691 = vpop.f32.mrb[0].mxu0
    %v692 = vadd.f32 0.0, %v691
    %693 = vdwg.mxu0
    %694 = vmatprep.subr.mxu0 %v45
    %695 = vmatpush1.msra.mxu0 %v44
    %696 = vmatprep.subr.mxu0 %v61
    %697 = vmatpush1.msra.mxu0 %v60
    %698 = vmatprep.subr.mxu0 %v77
    %699 = vmatpush1.msra.mxu0 %v76
    %700 = vmatprep.subr.mxu0 %v93
    %701 = vmatpush1.msra.mxu0 %v92
    %702 = vmatprep.subr.mxu0 %v109
    %703 = vmatpush1.msra.mxu0 %v108
    %704 = vmatprep.subr.mxu0 %v125
    %705 = vmatpush1.msra.mxu0 %v124
    %706 = vmatprep.subr.mxu0 %v141
    %707 = vmatpush1.msra.mxu0 %v140
    %708 = vmatprep.subr.mxu0 %v157
    %709 = vmatpush1.msra.mxu0 %v156
    %710 = vmatprep.subr.mxu0 %v173
    %711 = vmatpush1.msra.mxu0 %v172
    %712 = vmatprep.subr.mxu0 %v189
    %713 = vmatpush1.msra.mxu0 %v188
    %714 = vmatprep.subr.mxu0 %v205
    %715 = vmatpush1.msra.mxu0 %v204
    %716 = vmatprep.subr.mxu0 %v221
    %717 = vmatpush1.msra.mxu0 %v220
    %718 = vmatprep.subr.mxu0 %v237
    %719 = vmatpush1.msra.mxu0 %v236
    %720 = vmatprep.subr.mxu0 %v253
    %721 = vmatpush1.msra.mxu0 %v252
    %722 = vmatprep.subr.mxu0 %v269
    %723 = vmatpush1.msra.mxu0 %v268
    %724 = vmatprep.subr.mxu0 %v285
    %725 = vmatpush1.msra.mxu0 %v284
    %726 = vmatprep.subr.mxu0 %v301
    %727 = vmatpush1.msra.mxu0 %v300
    %728 = vmatprep.subr.mxu0 %v317
    %729 = vmatpush1.msra.mxu0 %v316
    %730 = vmatprep.subr.mxu0 %v333
    %731 = vmatpush1.msra.mxu0 %v332
    %732 = vmatprep.subr.mxu0 %v349
    %733 = vmatpush1.msra.mxu0 %v348
    %734 = vmatprep.subr.mxu0 %v365
    %735 = vmatpush1.msra.mxu0 %v364
    %736 = vmatprep.subr.mxu0 %v381
    %737 = vmatpush1.msra.mxu0 %v380
    %738 = vmatprep.subr.mxu0 %v397
    %739 = vmatpush1.msra.mxu0 %v396
    %740 = vmatprep.subr.mxu0 %v413
    %741 = vmatpush1.msra.mxu0 %v412
    %742 = vmatprep.subr.mxu0 %v429
    %743 = vmatpush1.msra.mxu0 %v428
    %744 = vmatprep.subr.mxu0 %v445
    %745 = vmatpush1.msra.mxu0 %v444
    %746 = vmatprep.subr.mxu0 %v461
    %747 = vmatpush1.msra.mxu0 %v460
    %748 = vmatprep.subr.mxu0 %v477
    %749 = vmatpush1.msra.mxu0 %v476
    %750 = vmatprep.subr.mxu0 %v493
    %751 = vmatpush1.msra.mxu0 %v492
    %752 = vmatprep.subr.mxu0 %v509
    %753 = vmatpush1.msra.mxu0 %v508
    %754 = vmatprep.subr.mxu0 %v525
    %755 = vmatpush1.msra.mxu0 %v524
    %756 = vmatprep.subr.mxu0 %v541
    %757 = vmatpush1.msra.mxu0 %v540
    %758 = vmatprep.mubr.f32.mxu0 %v39
    %759 = vmatmul.mubr.f32.gmra.mrb[0].mxu0 %v38
    %v760 = vpop.f32.mrb[0].mxu0
    %v761 = vadd.f32 0.0, %v760
    %v762 = vpop.f32.mrb[0].mxu0
    %v763 = vadd.f32 0.0, %v762
    %764 = vdwg.mxu0
    %765 = vmatprep.subr.mxu0 %v47
    %766 = vmatpush1.msra.mxu0 %v46
    %767 = vmatprep.subr.mxu0 %v63
    %768 = vmatpush1.msra.mxu0 %v62
    %769 = vmatprep.subr.mxu0 %v79
    %770 = vmatpush1.msra.mxu0 %v78
    %771 = vmatprep.subr.mxu0 %v95
    %772 = vmatpush1.msra.mxu0 %v94
    %773 = vmatprep.subr.mxu0 %v111
    %774 = vmatpush1.msra.mxu0 %v110
    %775 = vmatprep.subr.mxu0 %v127
    %776 = vmatpush1.msra.mxu0 %v126
    %777 = vmatprep.subr.mxu0 %v143
    %778 = vmatpush1.msra.mxu0 %v142
    %779 = vmatprep.subr.mxu0 %v159
    %780 = vmatpush1.msra.mxu0 %v158
    %781 = vmatprep.subr.mxu0 %v175
    %782 = vmatpush1.msra.mxu0 %v174
    %783 = vmatprep.subr.mxu0 %v191
    %784 = vmatpush1.msra.mxu0 %v190
    %785 = vmatprep.subr.mxu0 %v207
    %786 = vmatpush1.msra.mxu0 %v206
    %787 = vmatprep.subr.mxu0 %v223
    %788 = vmatpush1.msra.mxu0 %v222
    %789 = vmatprep.subr.mxu0 %v239
    %790 = vmatpush1.msra.mxu0 %v238
    %791 = vmatprep.subr.mxu0 %v255
    %792 = vmatpush1.msra.mxu0 %v254
    %793 = vmatprep.subr.mxu0 %v271
    %794 = vmatpush1.msra.mxu0 %v270
    %795 = vmatprep.subr.mxu0 %v287
    %796 = vmatpush1.msra.mxu0 %v286
    %797 = vmatprep.subr.mxu0 %v303
    %798 = vmatpush1.msra.mxu0 %v302
    %799 = vmatprep.subr.mxu0 %v319
    %800 = vmatpush1.msra.mxu0 %v318
    %801 = vmatprep.subr.mxu0 %v335
    %802 = vmatpush1.msra.mxu0 %v334
    %803 = vmatprep.subr.mxu0 %v351
    %804 = vmatpush1.msra.mxu0 %v350
    %805 = vmatprep.subr.mxu0 %v367
    %806 = vmatpush1.msra.mxu0 %v366
    %807 = vmatprep.subr.mxu0 %v383
    %808 = vmatpush1.msra.mxu0 %v382
    %809 = vmatprep.subr.mxu0 %v399
    %810 = vmatpush1.msra.mxu0 %v398
    %811 = vmatprep.subr.mxu0 %v415
    %812 = vmatpush1.msra.mxu0 %v414
    %813 = vmatprep.subr.mxu0 %v431
    %814 = vmatpush1.msra.mxu0 %v430
    %815 = vmatprep.subr.mxu0 %v447
    %816 = vmatpush1.msra.mxu0 %v446
    %817 = vmatprep.subr.mxu0 %v463
    %818 = vmatpush1.msra.mxu0 %v462
    %819 = vmatprep.subr.mxu0 %v479
    %820 = vmatpush1.msra.mxu0 %v478
    %821 = vmatprep.subr.mxu0 %v495
    %822 = vmatpush1.msra.mxu0 %v494
    %823 = vmatprep.subr.mxu0 %v511
    %824 = vmatpush1.msra.mxu0 %v510
    %825 = vmatprep.subr.mxu0 %v527
    %826 = vmatpush1.msra.mxu0 %v526
    %827 = vmatprep.subr.mxu0 %v543
    %828 = vmatpush1.msra.mxu0 %v542
    %829 = vmatprep.mubr.f32.mxu0 %v39
    %830 = vmatmul.mubr.f32.gmra.mrb[0].mxu0 %v38
    %v831 = vpop.f32.mrb[0].mxu0
    %v832 = vadd.f32 0.0, %v831
    %v833 = vpop.f32.mrb[0].mxu0
    %v834 = vadd.f32 0.0, %v833
    %835 = vdwg.mxu0
    %836 = vmatprep.subr.mxu0 %v49
    %837 = vmatpush1.msra.mxu0 %v48
    %838 = vmatprep.subr.mxu0 %v65
    %839 = vmatpush1.msra.mxu0 %v64
    %840 = vmatprep.subr.mxu0 %v81
    %841 = vmatpush1.msra.mxu0 %v80
    %842 = vmatprep.subr.mxu0 %v97
    %843 = vmatpush1.msra.mxu0 %v96
    %844 = vmatprep.subr.mxu0 %v113
    %845 = vmatpush1.msra.mxu0 %v112
    %846 = vmatprep.subr.mxu0 %v129
    %847 = vmatpush1.msra.mxu0 %v128
    %848 = vmatprep.subr.mxu0 %v145
    %849 = vmatpush1.msra.mxu0 %v144
    %850 = vmatprep.subr.mxu0 %v161
    %851 = vmatpush1.msra.mxu0 %v160
    %852 = vmatprep.subr.mxu0 %v177
    %853 = vmatpush1.msra.mxu0 %v176
    %854 = vmatprep.subr.mxu0 %v193
    %855 = vmatpush1.msra.mxu0 %v192
    %856 = vmatprep.subr.mxu0 %v209
    %857 = vmatpush1.msra.mxu0 %v208
    %858 = vmatprep.subr.mxu0 %v225
    %859 = vmatpush1.msra.mxu0 %v224
    %860 = vmatprep.subr.mxu0 %v241
    %861 = vmatpush1.msra.mxu0 %v240
    %862 = vmatprep.subr.mxu0 %v257
    %863 = vmatpush1.msra.mxu0 %v256
    %864 = vmatprep.subr.mxu0 %v273
    %865 = vmatpush1.msra.mxu0 %v272
    %866 = vmatprep.subr.mxu0 %v289
    %867 = vmatpush1.msra.mxu0 %v288
    %868 = vmatprep.subr.mxu0 %v305
    %869 = vmatpush1.msra.mxu0 %v304
    %870 = vmatprep.subr.mxu0 %v321
    %871 = vmatpush1.msra.mxu0 %v320
    %872 = vmatprep.subr.mxu0 %v337
    %873 = vmatpush1.msra.mxu0 %v336
    %874 = vmatprep.subr.mxu0 %v353
    %875 = vmatpush1.msra.mxu0 %v352
    %876 = vmatprep.subr.mxu0 %v369
    %877 = vmatpush1.msra.mxu0 %v368
    %878 = vmatprep.subr.mxu0 %v385
    %879 = vmatpush1.msra.mxu0 %v384
    %880 = vmatprep.subr.mxu0 %v401
    %881 = vmatpush1.msra.mxu0 %v400
    %882 = vmatprep.subr.mxu0 %v417
    %883 = vmatpush1.msra.mxu0 %v416
    %884 = vmatprep.subr.mxu0 %v433
    %885 = vmatpush1.msra.mxu0 %v432
    %886 = vmatprep.subr.mxu0 %v449
    %887 = vmatpush1.msra.mxu0 %v448
    %888 = vmatprep.subr.mxu0 %v465
    %889 = vmatpush1.msra.mxu0 %v464
    %890 = vmatprep.subr.mxu0 %v481
    %891 = vmatpush1.msra.mxu0 %v480
    %892 = vmatprep.subr.mxu0 %v497
    %893 = vmatpush1.msra.mxu0 %v496
    %894 = vmatprep.subr.mxu0 %v513
    %895 = vmatpush1.msra.mxu0 %v512
    %896 = vmatprep.subr.mxu0 %v529
    %897 = vmatpush1.msra.mxu0 %v528
    %898 = vmatprep.subr.mxu0 %v545
    %899 = vmatpush1.msra.mxu0 %v544
    %900 = vmatprep.mubr.f32.mxu0 %v39
    %901 = vmatmul.mubr.f32.gmra.mrb[0].mxu0 %v38
    %v902 = vpop.f32.mrb[0].mxu0
    %v903 = vadd.f32 0.0, %v902
    %v904 = vpop.f32.mrb[0].mxu0
    %v905 = vadd.f32 0.0, %v904
    %906 = vdwg.mxu0
    %907 = vmatprep.subr.mxu0 %v51
    %908 = vmatpush1.msra.mxu0 %v50
    %909 = vmatprep.subr.mxu0 %v67
    %910 = vmatpush1.msra.mxu0 %v66
    %911 = vmatprep.subr.mxu0 %v83
    %912 = vmatpush1.msra.mxu0 %v82
    %913 = vmatprep.subr.mxu0 %v99
    %914 = vmatpush1.msra.mxu0 %v98
    %915 = vmatprep.subr.mxu0 %v115
    %916 = vmatpush1.msra.mxu0 %v114
    %917 = vmatprep.subr.mxu0 %v131
    %918 = vmatpush1.msra.mxu0 %v130
    %919 = vmatprep.subr.mxu0 %v147
    %920 = vmatpush1.msra.mxu0 %v146
    %921 = vmatprep.subr.mxu0 %v163
    %922 = vmatpush1.msra.mxu0 %v162
    %923 = vmatprep.subr.mxu0 %v179
    %924 = vmatpush1.msra.mxu0 %v178
    %925 = vmatprep.subr.mxu0 %v195
    %926 = vmatpush1.msra.mxu0 %v194
    %927 = vmatprep.subr.mxu0 %v211
    %928 = vmatpush1.msra.mxu0 %v210
    %929 = vmatprep.subr.mxu0 %v227
    %930 = vmatpush1.msra.mxu0 %v226
    %931 = vmatprep.subr.mxu0 %v243
    %932 = vmatpush1.msra.mxu0 %v242
    %933 = vmatprep.subr.mxu0 %v259
    %934 = vmatpush1.msra.mxu0 %v258
    %935 = vmatprep.subr.mxu0 %v275
    %936 = vmatpush1.msra.mxu0 %v274
    %937 = vmatprep.subr.mxu0 %v291
    %938 = vmatpush1.msra.mxu0 %v290
    %939 = vmatprep.subr.mxu0 %v307
    %940 = vmatpush1.msra.mxu0 %v306
    %941 = vmatprep.subr.mxu0 %v323
    %942 = vmatpush1.msra.mxu0 %v322
    %943 = vmatprep.subr.mxu0 %v339
    %944 = vmatpush1.msra.mxu0 %v338
    %945 = vmatprep.subr.mxu0 %v355
    %946 = vmatpush1.msra.mxu0 %v354
    %947 = vmatprep.subr.mxu0 %v371
    %948 = vmatpush1.msra.mxu0 %v370
    %949 = vmatprep.subr.mxu0 %v387
    %950 = vmatpush1.msra.mxu0 %v386
    %951 = vmatprep.subr.mxu0 %v403
    %952 = vmatpush1.msra.mxu0 %v402
    %953 = vmatprep.subr.mxu0 %v419
    %954 = vmatpush1.msra.mxu0 %v418
    %955 = vmatprep.subr.mxu0 %v435
    %956 = vmatpush1.msra.mxu0 %v434
    %957 = vmatprep.subr.mxu0 %v451
    %958 = vmatpush1.msra.mxu0 %v450
    %959 = vmatprep.subr.mxu0 %v467
    %960 = vmatpush1.msra.mxu0 %v466
    %961 = vmatprep.subr.mxu0 %v483
    %962 = vmatpush1.msra.mxu0 %v482
    %963 = vmatprep.subr.mxu0 %v499
    %964 = vmatpush1.msra.mxu0 %v498
    %965 = vmatprep.subr.mxu0 %v515
    %966 = vmatpush1.msra.mxu0 %v514
    %967 = vmatprep.subr.mxu0 %v531
    %968 = vmatpush1.msra.mxu0 %v530
    %969 = vmatprep.subr.mxu0 %v547
    %970 = vmatpush1.msra.mxu0 %v546
    %971 = vmatprep.mubr.f32.mxu0 %v39
    %972 = vmatmul.mubr.f32.gmra.mrb[0].mxu0 %v38
    %v973 = vpop.f32.mrb[0].mxu0
    %v974 = vadd.f32 0.0, %v973
    %v975 = vpop.f32.mrb[0].mxu0
    %v976 = vadd.f32 0.0, %v975
    %977 = vdwg.mxu0
    %978 = vmatprep.subr.mxu0 %v53
    %979 = vmatpush1.msra.mxu0 %v52
    %980 = vmatprep.subr.mxu0 %v69
    %981 = vmatpush1.msra.mxu0 %v68
    %982 = vmatprep.subr.mxu0 %v85
    %983 = vmatpush1.msra.mxu0 %v84
    %984 = vmatprep.subr.mxu0 %v101
    %985 = vmatpush1.msra.mxu0 %v100
    %986 = vmatprep.subr.mxu0 %v117
    %987 = vmatpush1.msra.mxu0 %v116
    %988 = vmatprep.subr.mxu0 %v133
    %989 = vmatpush1.msra.mxu0 %v132
    %990 = vmatprep.subr.mxu0 %v149
    %991 = vmatpush1.msra.mxu0 %v148
    %992 = vmatprep.subr.mxu0 %v165
    %993 = vmatpush1.msra.mxu0 %v164
    %994 = vmatprep.subr.mxu0 %v181
    %995 = vmatpush1.msra.mxu0 %v180
    %996 = vmatprep.subr.mxu0 %v197
    %997 = vmatpush1.msra.mxu0 %v196
    %998 = vmatprep.subr.mxu0 %v213
    %999 = vmatpush1.msra.mxu0 %v212
    %1000 = vmatprep.subr.mxu0 %v229
    %1001 = vmatpush1.msra.mxu0 %v228
    %1002 = vmatprep.subr.mxu0 %v245
    %1003 = vmatpush1.msra.mxu0 %v244
    %1004 = vmatprep.subr.mxu0 %v261
    %1005 = vmatpush1.msra.mxu0 %v260
    %1006 = vmatprep.subr.mxu0 %v277
    %1007 = vmatpush1.msra.mxu0 %v276
    %1008 = vmatprep.subr.mxu0 %v293
    %1009 = vmatpush1.msra.mxu0 %v292
    %1010 = vmatprep.subr.mxu0 %v309
    %1011 = vmatpush1.msra.mxu0 %v308
    %1012 = vmatprep.subr.mxu0 %v325
    %1013 = vmatpush1.msra.mxu0 %v324
    %1014 = vmatprep.subr.mxu0 %v341
    %1015 = vmatpush1.msra.mxu0 %v340
    %1016 = vmatprep.subr.mxu0 %v357
    %1017 = vmatpush1.msra.mxu0 %v356
    %1018 = vmatprep.subr.mxu0 %v373
    %1019 = vmatpush1.msra.mxu0 %v372
    %1020 = vmatprep.subr.mxu0 %v389
    %1021 = vmatpush1.msra.mxu0 %v388
    %1022 = vmatprep.subr.mxu0 %v405
    %1023 = vmatpush1.msra.mxu0 %v404
    %1024 = vmatprep.subr.mxu0 %v421
    %1025 = vmatpush1.msra.mxu0 %v420
    %1026 = vmatprep.subr.mxu0 %v437
    %1027 = vmatpush1.msra.mxu0 %v436
    %1028 = vmatprep.subr.mxu0 %v453
    %1029 = vmatpush1.msra.mxu0 %v452
    %1030 = vmatprep.subr.mxu0 %v469
    %1031 = vmatpush1.msra.mxu0 %v468
    %1032 = vmatprep.subr.mxu0 %v485
    %1033 = vmatpush1.msra.mxu0 %v484
    %1034 = vmatprep.subr.mxu0 %v501
    %1035 = vmatpush1.msra.mxu0 %v500
    %1036 = vmatprep.subr.mxu0 %v517
    %1037 = vmatpush1.msra.mxu0 %v516
    %1038 = vmatprep.subr.mxu0 %v533
    %1039 = vmatpush1.msra.mxu0 %v532
    %1040 = vmatprep.subr.mxu0 %v549
    %1041 = vmatpush1.msra.mxu0 %v548
    %1042 = vmatprep.mubr.f32.mxu0 %v39
    %1043 = vmatmul.mubr.f32.gmra.mrb[0].mxu0 %v38
    %v1044 = vpop.f32.mrb[0].mxu0
    %v1045 = vadd.f32 0.0, %v1044
    %v1046 = vpop.f32.mrb[0].mxu0
    %v1047 = vadd.f32 0.0, %v1046
    %1048 = vdwg.mxu0
    %1049 = vmatprep.subr.mxu0 %v55
    %1050 = vmatpush1.msra.mxu0 %v54
    %1051 = vmatprep.subr.mxu0 %v71
    %1052 = vmatpush1.msra.mxu0 %v70
    %1053 = vmatprep.subr.mxu0 %v87
    %1054 = vmatpush1.msra.mxu0 %v86
    %1055 = vmatprep.subr.mxu0 %v103
    %1056 = vmatpush1.msra.mxu0 %v102
    %1057 = vmatprep.subr.mxu0 %v119
    %1058 = vmatpush1.msra.mxu0 %v118
    %1059 = vmatprep.subr.mxu0 %v135
    %1060 = vmatpush1.msra.mxu0 %v134
    %1061 = vmatprep.subr.mxu0 %v151
    %1062 = vmatpush1.msra.mxu0 %v150
    %1063 = vmatprep.subr.mxu0 %v167
    %1064 = vmatpush1.msra.mxu0 %v166
    %1065 = vmatprep.subr.mxu0 %v183
    %1066 = vmatpush1.msra.mxu0 %v182
    %1067 = vmatprep.subr.mxu0 %v199
    %1068 = vmatpush1.msra.mxu0 %v198
    %1069 = vmatprep.subr.mxu0 %v215
    %1070 = vmatpush1.msra.mxu0 %v214
    %1071 = vmatprep.subr.mxu0 %v231
    %1072 = vmatpush1.msra.mxu0 %v230
    %1073 = vmatprep.subr.mxu0 %v247
    %1074 = vmatpush1.msra.mxu0 %v246
    %1075 = vmatprep.subr.mxu0 %v263
    %1076 = vmatpush1.msra.mxu0 %v262
    %1077 = vmatprep.subr.mxu0 %v279
    %1078 = vmatpush1.msra.mxu0 %v278
    %1079 = vmatprep.subr.mxu0 %v295
    %1080 = vmatpush1.msra.mxu0 %v294
    %1081 = vmatprep.subr.mxu0 %v311
    %1082 = vmatpush1.msra.mxu0 %v310
    %1083 = vmatprep.subr.mxu0 %v327
    %1084 = vmatpush1.msra.mxu0 %v326
    %1085 = vmatprep.subr.mxu0 %v343
    %1086 = vmatpush1.msra.mxu0 %v342
    %1087 = vmatprep.subr.mxu0 %v359
    %1088 = vmatpush1.msra.mxu0 %v358
    %1089 = vmatprep.subr.mxu0 %v375
    %1090 = vmatpush1.msra.mxu0 %v374
    %1091 = vmatprep.subr.mxu0 %v391
    %1092 = vmatpush1.msra.mxu0 %v390
    %1093 = vmatprep.subr.mxu0 %v407
    %1094 = vmatpush1.msra.mxu0 %v406
    %1095 = vmatprep.subr.mxu0 %v423
    %1096 = vmatpush1.msra.mxu0 %v422
    %1097 = vmatprep.subr.mxu0 %v439
    %1098 = vmatpush1.msra.mxu0 %v438
    %1099 = vmatprep.subr.mxu0 %v455
    %1100 = vmatpush1.msra.mxu0 %v454
    %1101 = vmatprep.subr.mxu0 %v471
    %1102 = vmatpush1.msra.mxu0 %v470
    %1103 = vmatprep.subr.mxu0 %v487
    %1104 = vmatpush1.msra.mxu0 %v486
    %1105 = vmatprep.subr.mxu0 %v503
    %1106 = vmatpush1.msra.mxu0 %v502
    %1107 = vmatprep.subr.mxu0 %v519
    %1108 = vmatpush1.msra.mxu0 %v518
    %1109 = vmatprep.subr.mxu0 %v535
    %1110 = vmatpush1.msra.mxu0 %v534
    %1111 = vmatprep.subr.mxu0 %v551
    %1112 = vmatpush1.msra.mxu0 %v550
    %1113 = vmatprep.mubr.f32.mxu0 %v39
    %1114 = vmatmul.mubr.f32.gmra.mrb[0].mxu0 %v38
    %v1115 = vpop.f32.mrb[0].mxu0
    %v1116 = vadd.f32 0.0, %v1115
    %v1117 = vpop.f32.mrb[0].mxu0
    %v1118 = vadd.f32 0.0, %v1117
    %1119 = vdwg.mxu0
    %1120 = vst [vmem:[#allocation7] sm:$0xff] %v619
    %1121 = vst [vmem:[#allocation7 + $0x8] sm:$0xff] %v621
    %1122 = vst [vmem:[#allocation7 + $0x10] sm:$0xff] %v690
    %1123 = vst [vmem:[#allocation7 + $0x18] sm:$0xff] %v692
    %1124 = vst [vmem:[#allocation7 + $0x20] sm:$0xff] %v761
    %1125 = vst [vmem:[#allocation7 + $0x28] sm:$0xff] %v763
    %1126 = vst [vmem:[#allocation7 + $0x30] sm:$0xff] %v832
    %1127 = vst [vmem:[#allocation7 + $0x38] sm:$0xff] %v834
    %1128 = vst [vmem:[#allocation7 + $0x40] sm:$0xff] %v903
    %1129 = vst [vmem:[#allocation7 + $0x48] sm:$0xff] %v905
    %1130 = vst [vmem:[#allocation7 + $0x50] sm:$0xff] %v974
    %1131 = vst [vmem:[#allocation7 + $0x58] sm:$0xff] %v976
    %1132 = vst [vmem:[#allocation7 + $0x60] sm:$0xff] %v1045
    %1133 = vst [vmem:[#allocation7 + $0x68] sm:$0xff] %v1047
    %1134 = vst [vmem:[#allocation7 + $0x70] sm:$0xff] %v1116
    %1135 = vst [vmem:[#allocation7 + $0x78] sm:$0xff] %v1118
    // Predicated region
    $region18: #{tpu_custom_call.1} parent=1 // pred_check
      _
    $region19: #{tpu_custom_call.1} parent=1 // pred_check_branch
      %1137 = sbr.rel (0) target = $region21
    $region20: #{tpu_custom_call.1} parent=1 // pred_region
      %s1139 = ssub.s32 2048, 2048
      %1140 = vsyncadd [#allocation4], %s1139
      %s1142 = sshll.u32 [#allocation7], 4
      %s1143 = int_to_ptr.vmem [resolvable:$true] %s1142
      %1145 = dma.vmem_to_hbm [thread:$0]  %s1143, 2048, %s2, [#allocation4]
    $region21: #{tpu_custom_call.1} parent=1 // pred_fallthru
      _
    // Predicated region
    $region22: #{tpu_custom_call.1} parent=1 // pred_check
      _
    $region23: #{tpu_custom_call.1} parent=1 // pred_check_branch
      %1147 = sbr.rel (0) target = $region25
    $region24: #{tpu_custom_call.1} parent=1 // pred_region
      %1148 = dma.done [#allocation4], 2048
    $region25: #{tpu_custom_call.1} parent=1 // pred_fallthru
      _
    %1149 = vsyncpa [#allocation3], 1
    %1150 = vsyncpa [#allocation6], 1
    %1151 = vsyncpa [#allocation4], 1

</llo_original>
